<compile_context>
chip_gen: v7x
topology: tpu7x:2x2x1
jax: 0.10.0
libtpu: 0.0.40
codegen_flags: <defaults>
</compile_context>

<pallas_src>
import jax
import jax.numpy as jnp
from jax.experimental import pallas as pl
from jax.experimental.pallas import tpu as pltpu

LANE = 128      # vreg lane width
SUBLANE = 8     # vreg sublane count (f32)


def _round_up(x, m):
    return (x + m - 1) // m * m


# --------------------------------------------------------------------------
# Kernel body (shared by the batch variant and the population variant; in the
# population variant the leading axis is squeezed so refs are 2-D here too).
# --------------------------------------------------------------------------
def _mlp_kernel(x_ref, w0_ref, b0_ref, w1_ref, b1_ref, w2_ref, b2_ref, o_ref):
    cdt = w0_ref.dtype                         # MXU compute dtype (bf16)
    x = x_ref[...].astype(cdt)                 # f32 -> bf16 cast on VPU (cheap)
    h = jnp.dot(x, w0_ref[...], preferred_element_type=jnp.float32) + b0_ref[...]
    h = jnp.dot(h.astype(cdt), w1_ref[...],
                preferred_element_type=jnp.float32) + b1_ref[...]
    y = jnp.dot(h.astype(cdt), w2_ref[...],
                preferred_element_type=jnp.float32) + b2_ref[...]
    o_ref[...] = y.astype(o_ref.dtype)


# --------------------------------------------------------------------------
# One-time parameter packing (layout plumbing, not per-forward work)
# --------------------------------------------------------------------------
def pack_params(params, compute_dtype=jnp.bfloat16):
    """Transpose weights to (in, out), pad output features (and hidden-layer
    input features) to 128-lane multiples, cast to the MXU compute dtype.
    Layer 0 keeps K = obs_dim unpadded so the raw (B, obs_dim) x feeds the
    kernel directly (no padded-input HBM traffic).  Biases stay f32."""
    packed = {}
    for i in range(3):
        w = params[f"W{i}"]            # (out_features, in_features)
        b = params[f"b{i}"]            # (out_features,)
        out_f, in_f = w.shape
        in_p = in_f if i == 0 else _round_up(in_f, LANE)
        out_p = _round_up(out_f, LANE)
        wt = jnp.zeros((in_p, out_p), compute_dtype)
        wt = wt.at[:in_f, :out_f].set(w.T.astype(compute_dtype))
        bp = jnp.zeros((1, out_p), jnp.float32)
        bp = bp.at[0, :out_f].set(b.astype(jnp.float32))
        packed[f"W{i}"] = wt
        packed[f"b{i}"] = bp
    return packed


def pack_params_population(params_list, compute_dtype=jnp.bfloat16):
    """Stack per-agent packed params along a leading population axis."""
    per_agent = [pack_params(p, compute_dtype) for p in params_list]
    return {k: jnp.stack([pa[k] for pa in per_agent]) for k in per_agent[0]}


# --------------------------------------------------------------------------
# Tiling / VMEM sizing helpers
# --------------------------------------------------------------------------
def _choose_batch_tiling(B, tile_b_max, min_split=256):
    """Near-equal batch tiles; even (>=2) step count for large B so v7x's two
    TensorCores both get work; single full-array block for small B."""
    if B <= max(2 * min_split, SUBLANE):
        return B, 1                       # one block == full array dims (legal)
    n = pl.cdiv(B, tile_b_max)
    if n == 1:
        n = 2                             # split big-but-one-tile B across TCs
    elif n % 2:
        n += 1                            # even step count for megacore
    tile_b = _round_up(pl.cdiv(B, n), SUBLANE)
    n = pl.cdiv(B, tile_b)                # re-derive after rounding
    return tile_b, n


def _vmem_estimate(tile_b, obs_dim, h1_p, h2_p, out_p, w_dtype, out_dtype):
    """Rough double-buffered working-set estimate (bytes)."""
    wbytes = jnp.dtype(w_dtype).itemsize
    obytes = jnp.dtype(out_dtype).itemsize
    x_blk = tile_b * obs_dim * 4
    o_blk = tile_b * out_p * obytes
    w = (obs_dim * h1_p + h1_p * h2_p + h2_p * out_p) * wbytes
    b = (h1_p + h2_p + out_p) * 4
    return 2 * (x_blk + o_blk) + 2 * (w + b)


# --------------------------------------------------------------------------
# Forward passes
# --------------------------------------------------------------------------
def agent_forward(x, packed, act_dim, *, tile_b_max=4096,
                  out_dtype=jnp.float32, full_output=False):
    """Single agent.  x: (B, obs_dim) float32 (unpadded); packed: pack_params().
    Set out_dtype=jnp.bfloat16 to halve output writeback; full_output=True to
    return the lane-dense (B, 128) slab and fuse the act_dim slice downstream."""
    B, obs_dim = x.shape
    w0, b0 = packed["W0"], packed["b0"]
    w1, b1 = packed["W1"], packed["b1"]
    w2, b2 = packed["W2"], packed["b2"]
    assert w0.shape[0] == obs_dim, "packed W0 K-dim must equal obs_dim"
    h1_p, h2_p, out_p = w0.shape[1], w1.shape[1], w2.shape[1]

    tile_b, n_steps = _choose_batch_tiling(B, tile_b_max)

    # Only raise the scoped-VMEM cap when actually needed (v5e default 16 MiB).
    est = _vmem_estimate(tile_b, obs_dim, h1_p, h2_p, out_p, w0.dtype, out_dtype)
    cp_kwargs = dict(dimension_semantics=("parallel",))
    if est > (12 << 20):
        cp_kwargs["vmem_limit_bytes"] = int(min(est + (4 << 20), 48 << 20))

    const = lambda i: (0, 0)   # weights/biases stay VMEM-resident across grid
    out = pl.pallas_call(
        _mlp_kernel,
        out_shape=jax.ShapeDtypeStruct((B, out_p), out_dtype),
        grid=(n_steps,),
        in_specs=[
            pl.BlockSpec((tile_b, obs_dim), lambda i: (i, 0)),   # x (unpadded)
            pl.BlockSpec((obs_dim, h1_p), const),
            pl.BlockSpec((1, h1_p), const),
            pl.BlockSpec((h1_p, h2_p), const),
            pl.BlockSpec((1, h2_p), const),
            pl.BlockSpec((h2_p, out_p), const),
            pl.BlockSpec((1, out_p), const),
        ],
        out_specs=pl.BlockSpec((tile_b, out_p), lambda i: (i, 0)),
        compiler_params=pltpu.CompilerParams(**cp_kwargs),
    )(x, w0, b0, w1, b1, w2, b2)

    if full_output:
        return out                         # (B, out_p) lane-dense slab
    return out[:, :act_dim]


def agent_forward_population(x, packed, act_dim, *, out_dtype=jnp.float32,
                             full_output=False):
    """ES fast path: one pallas_call for the whole population.

    x: (P, B, obs_dim) float32 (B is the tiny per-agent rollout batch, e.g. 2);
    packed: pack_params_population() output (weights (P, in, out), biases
    (P, 1, out)).  The grid is the population axis ("parallel" so v7x shards
    agents across its two TCs); kernel-launch overhead is paid once for all
    agents instead of once per agent."""
    P, B, obs_dim = x.shape
    w0, b0 = packed["W0"], packed["b0"]
    w1, b1 = packed["W1"], packed["b1"]
    w2, b2 = packed["W2"], packed["b2"]
    assert w0.shape[1] == obs_dim
    h1_p, h2_p, out_p = w0.shape[-1], w1.shape[-1], w2.shape[-1]

    lead = lambda p: (p, 0, 0)   # leading dim = None (squeezed) -> 2-D kernel refs
    out = pl.pallas_call(
        _mlp_kernel,
        out_shape=jax.ShapeDtypeStruct((P, B, out_p), out_dtype),
        grid=(P,),
        in_specs=[
            pl.BlockSpec((None, B, obs_dim), lead),
            pl.BlockSpec((None, obs_dim, h1_p), lead),
            pl.BlockSpec((None, 1, h1_p), lead),
            pl.BlockSpec((None, h1_p, h2_p), lead),
            pl.BlockSpec((None, 1, h2_p), lead),
            pl.BlockSpec((None, h2_p, out_p), lead),
            pl.BlockSpec((None, 1, out_p), lead),
        ],
        out_specs=pl.BlockSpec((None, B, out_p), lead),
        compiler_params=pltpu.CompilerParams(
            dimension_semantics=("parallel",)),
    )(x, w0, b0, w1, b1, w2, b2)

    if full_output:
        return out
    return out[..., :act_dim]


# --------------------------------------------------------------------------
# Reference + init
# --------------------------------------------------------------------------
def agent_forward_ref(x, params):
    """Pure-JAX f32 reference of the PyTorch forward."""
    h = x @ params["W0"].T + params["b0"]
    h = h @ params["W1"].T + params["b1"]
    return h @ params["W2"].T + params["b2"]


def init_params(key, obs_dim, act_dim, d_hidden=(80, 80)):
    """Weights ~ N(0,1) (nn.init.normal_), biases ~ U(-1/sqrt(fan_in), ...)
    (PyTorch Linear default bias init)."""
    sizes = [obs_dim] + list(d_hidden) + [act_dim]
    params = {}
    for i in range(len(sizes) - 1):
        fan_in, fan_out = sizes[i], sizes[i + 1]
        key, kw, kb = jax.random.split(key, 3)
        bound = 1.0 / jnp.sqrt(fan_in)
        params[f"W{i}"] = jax.random.normal(kw, (fan_out, fan_in), jnp.float32)
        params[f"b{i}"] = jax.random.uniform(
            kb, (fan_out,), jnp.float32, minval=-bound, maxval=bound
        )
    return params


def _check(y, y_ref, tol=5e-2, name=""):
    # Normalized max error (bf16 operands + f32 accumulation -> ~1% of scale).
    scale = float(jnp.maximum(jnp.max(jnp.abs(y_ref)), 1.0))
    err = float(jnp.max(jnp.abs(y.astype(jnp.float32) - y_ref))) / scale
    assert err < tol, f"{name}: normalized max error {err:.4f} >= {tol}"


if __name__ == "__main__":
    key = jax.random.PRNGKey(0)
    obs_dim, act_dim, batch = 16, 8, 2
    kp, kx, kbig, kpop = jax.random.split(key, 4)

    # --- single agent, tiny batch (matches the nn.Module spec) -------------
    params = init_params(kp, obs_dim, act_dim, d_hidden=[80, 80])
    x = jax.random.normal(kx, (batch, obs_dim), jnp.float32)
    packed = pack_params(params)
    y = agent_forward(x, packed, act_dim)
    jax.block_until_ready(y)
    assert y.shape == (batch, act_dim)
    _check(y, agent_forward_ref(x, params), name="single-step")

    # --- larger uneven batch: exercises balanced even-count multi-tiling ---
    xb = jax.random.normal(kbig, (600, obs_dim), jnp.float32)
    yb = agent_forward(xb, packed, act_dim, tile_b_max=256)
    jax.block_until_ready(yb)
    _check(yb, agent_forward_ref(xb, params), name="multi-tile")

    # --- population path: one pallas_call for all agents (ES use case) -----
    pop = 4
    plist = [init_params(k, obs_dim, act_dim, d_hidden=[80, 80])
             for k in jax.random.split(kpop, pop)]
    xp = jax.random.normal(kx, (pop, batch, obs_dim), jnp.float32)
    packed_pop = pack_params_population(plist)
    yp = agent_forward_population(xp, packed_pop, act_dim)
    jax.block_until_ready(yp)
    assert yp.shape == (pop, batch, act_dim)
    yp_ref = jnp.stack([agent_forward_ref(xp[i], plist[i]) for i in range(pop)])
    _check(yp, yp_ref, name="population")

    print("KERNEL_OK")
</pallas_src>

<mosaic_0001>
module attributes {stable_mosaic.version = 11 : i64} {
  func.func @_mlp_kernel(%arg0: i32, %arg1: memref<2x16xf32, #tpu.memory_space<vmem>>, %arg2: memref<16x128xbf16, #tpu.memory_space<vmem>>, %arg3: memref<1x128xf32, #tpu.memory_space<vmem>>, %arg4: memref<128x128xbf16, #tpu.memory_space<vmem>>, %arg5: memref<1x128xf32, #tpu.memory_space<vmem>>, %arg6: memref<128x128xbf16, #tpu.memory_space<vmem>>, %arg7: memref<1x128xf32, #tpu.memory_space<vmem>>, %arg8: memref<2x128xf32, #tpu.memory_space<vmem>>) attributes {dimension_semantics = [#tpu.dimension_semantics<parallel>], iteration_bounds = array<i64: 1>, scalar_prefetch = 0 : i64, scratch_operands = 0 : i64, tpu.core_type = #tpu.core_type<tc>, window_params = [{transform_indices = @transform_0, window_bounds = array<i64: 2, 16>}, {pipeline_mode = #tpu.pipeline_mode<synchronous>, transform_indices = @transform_1, window_bounds = array<i64: 16, 128>}, {pipeline_mode = #tpu.pipeline_mode<synchronous>, transform_indices = @transform_2, window_bounds = array<i64: 1, 128>}, {pipeline_mode = #tpu.pipeline_mode<synchronous>, transform_indices = @transform_3, window_bounds = array<i64: 128, 128>}, {pipeline_mode = #tpu.pipeline_mode<synchronous>, transform_indices = @transform_4, window_bounds = array<i64: 1, 128>}, {pipeline_mode = #tpu.pipeline_mode<synchronous>, transform_indices = @transform_5, window_bounds = array<i64: 128, 128>}, {pipeline_mode = #tpu.pipeline_mode<synchronous>, transform_indices = @transform_6, window_bounds = array<i64: 1, 128>}, {transform_indices = @transform_7, window_bounds = array<i64: 2, 128>}]} {
    %c0 = arith.constant 0 : index
    %c0_0 = arith.constant 0 : index
    %0 = vector.load %arg1[%c0, %c0_0] : memref<2x16xf32, #tpu.memory_space<vmem>>, vector<2x16xf32>
    %1 = arith.truncf %0 : vector<2x16xf32> to vector<2x16xbf16>
    %c0_1 = arith.constant 0 : index
    %c0_2 = arith.constant 0 : index
    %2 = vector.load %arg2[%c0_1, %c0_2] : memref<16x128xbf16, #tpu.memory_space<vmem>>, vector<16x128xbf16>
    %cst = arith.constant dense<0.000000e+00> : vector<2x128xf32>
    %3 = tpu.matmul %1, %2, %cst {dimension_numbers = #tpu.dot_dimension_numbers<[1], [0], [0], [1], [0, 0, 1, 1], [], []>} : vector<2x16xbf16>, vector<16x128xbf16>, vector<2x128xf32> -> vector<2x128xf32>
    %c0_3 = arith.constant 0 : index
    %c0_4 = arith.constant 0 : index
    %4 = vector.load %arg3[%c0_3, %c0_4] : memref<1x128xf32, #tpu.memory_space<vmem>>, vector<1x128xf32>
    %5 = vector.broadcast %4 : vector<1x128xf32> to vector<2x128xf32>
    %6 = arith.addf %3, %5 : vector<2x128xf32>
    %7 = arith.truncf %6 : vector<2x128xf32> to vector<2x128xbf16>
    %c0_5 = arith.constant 0 : index
    %c0_6 = arith.constant 0 : index
    %8 = vector.load %arg4[%c0_5, %c0_6] : memref<128x128xbf16, #tpu.memory_space<vmem>>, vector<128x128xbf16>
    %cst_7 = arith.constant dense<0.000000e+00> : vector<2x128xf32>
    %9 = tpu.matmul %7, %8, %cst_7 {dimension_numbers = #tpu.dot_dimension_numbers<[1], [0], [0], [1], [0, 0, 1, 1], [], []>} : vector<2x128xbf16>, vector<128x128xbf16>, vector<2x128xf32> -> vector<2x128xf32>
    %c0_8 = arith.constant 0 : index
    %c0_9 = arith.constant 0 : index
    %10 = vector.load %arg5[%c0_8, %c0_9] : memref<1x128xf32, #tpu.memory_space<vmem>>, vector<1x128xf32>
    %11 = vector.broadcast %10 : vector<1x128xf32> to vector<2x128xf32>
    %12 = arith.addf %9, %11 : vector<2x128xf32>
    %13 = arith.truncf %12 : vector<2x128xf32> to vector<2x128xbf16>
    %c0_10 = arith.constant 0 : index
    %c0_11 = arith.constant 0 : index
    %14 = vector.load %arg6[%c0_10, %c0_11] : memref<128x128xbf16, #tpu.memory_space<vmem>>, vector<128x128xbf16>
    %cst_12 = arith.constant dense<0.000000e+00> : vector<2x128xf32>
    %15 = tpu.matmul %13, %14, %cst_12 {dimension_numbers = #tpu.dot_dimension_numbers<[1], [0], [0], [1], [0, 0, 1, 1], [], []>} : vector<2x128xbf16>, vector<128x128xbf16>, vector<2x128xf32> -> vector<2x128xf32>
    %c0_13 = arith.constant 0 : index
    %c0_14 = arith.constant 0 : index
    %16 = vector.load %arg7[%c0_13, %c0_14] : memref<1x128xf32, #tpu.memory_space<vmem>>, vector<1x128xf32>
    %17 = vector.broadcast %16 : vector<1x128xf32> to vector<2x128xf32>
    %18 = arith.addf %15, %17 : vector<2x128xf32>
    %c0_15 = arith.constant 0 : index
    %c0_16 = arith.constant 0 : index
    %19 = vector.load %arg8[%c0_15, %c0_16] : memref<2x128xf32, #tpu.memory_space<vmem>>, vector<2x128xf32>
    tpu.vector_store %arg8[%c0_15, %c0_16], %18 {strides = array<i32>} : memref<2x128xf32, #tpu.memory_space<vmem>>, vector<2x128xf32>,
    return
  }
  func.func @transform_0(%arg0: i32) -> (i32, i32) {
    %c0_i32 = arith.constant 0 : i32
    %c0_i32_0 = arith.constant 0 : i32
    return %arg0, %c0_i32 : i32, i32
  }
  func.func @transform_1(%arg0: i32) -> (i32, i32) {
    %c0_i32 = arith.constant 0 : i32
    %c0_i32_0 = arith.constant 0 : i32
    %c0_i32_1 = arith.constant 0 : i32
    return %c0_i32, %c0_i32_0 : i32, i32
  }
  func.func @transform_2(%arg0: i32) -> (i32, i32) {
    %c0_i32 = arith.constant 0 : i32
    %c0_i32_0 = arith.constant 0 : i32
    %c0_i32_1 = arith.constant 0 : i32
    return %c0_i32, %c0_i32_0 : i32, i32
  }
  func.func @transform_3(%arg0: i32) -> (i32, i32) {
    %c0_i32 = arith.constant 0 : i32
    %c0_i32_0 = arith.constant 0 : i32
    %c0_i32_1 = arith.constant 0 : i32
    return %c0_i32, %c0_i32_0 : i32, i32
  }
  func.func @transform_4(%arg0: i32) -> (i32, i32) {
    %c0_i32 = arith.constant 0 : i32
    %c0_i32_0 = arith.constant 0 : i32
    %c0_i32_1 = arith.constant 0 : i32
    return %c0_i32, %c0_i32_0 : i32, i32
  }
  func.func @transform_5(%arg0: i32) -> (i32, i32) {
    %c0_i32 = arith.constant 0 : i32
    %c0_i32_0 = arith.constant 0 : i32
    %c0_i32_1 = arith.constant 0 : i32
    return %c0_i32, %c0_i32_0 : i32, i32
  }
  func.func @transform_6(%arg0: i32) -> (i32, i32) {
    %c0_i32 = arith.constant 0 : i32
    %c0_i32_0 = arith.constant 0 : i32
    %c0_i32_1 = arith.constant 0 : i32
    return %c0_i32, %c0_i32_0 : i32, i32
  }
  func.func @transform_7(%arg0: i32) -> (i32, i32) {
    %c0_i32 = arith.constant 0 : i32
    %c0_i32_0 = arith.constant 0 : i32
    return %arg0, %c0_i32 : i32, i32
  }
}

</mosaic_0001>

<llo_original>
// kernel: tpu_custom_call.1
$region0: #{tpu_custom_call.1}
  #allocation0 [shape = 'u32[]', space=smem, size = 0x4, offset = 0x4, fixed_abs, tag = 'smem constant byte address 0x4 - core index']
  #allocation1 [shape = 'u32[144,128]{1,0:T(1,128)}', space=vmem, size = 0x12000, scoped, tag = 'internal scratch']
  %s0 = inlined_call_operand.hbm [shape: f32[2,16], index: 0, kind: input, shape index: {}]
  %s1 = inlined_call_operand.hbm [shape: bf16[16,128], index: 1, kind: input, shape index: {}]
  %s2 = inlined_call_operand.vmem [shape: f32[1,128], index: 2, kind: input, shape index: {}]
  %s3 = inlined_call_operand.hbm [shape: bf16[128,128], index: 3, kind: input, shape index: {}]
  %s4 = inlined_call_operand.vmem [shape: f32[1,128], index: 4, kind: input, shape index: {}]
  %s5 = inlined_call_operand.hbm [shape: bf16[128,128], index: 5, kind: input, shape index: {}]
  %s6 = inlined_call_operand.vmem [shape: f32[1,128], index: 6, kind: input, shape index: {}]
  %s7 = inlined_call_operand.hbm [shape: f32[2,128], index: 7, kind: output, shape index: {}]
  %s8 = sld [smem:[#allocation0]]
  $region54: #{tpu_custom_call.1} parent=0
    _
  %s10 = ssub.s32 1, %s8
  %s11 = scalar_select 0, %s10, %s8
  $region1: #{tpu_custom_call.1} parent=0
    #allocation2 [shape = 'u8[1024]{0}', space=vmem, size = 0x400, scoped, tag = 'input window, operand 0, single buffered']
    #allocation3 [shape = 's32[1]{0}', space=sflag, size = 0x4, scoped, tag = 'scoped memory for tpu_custom_call.1']
    #allocation4 [shape = 's32[1]{0}', space=sflag, size = 0x4, scoped, tag = 'scoped memory for tpu_custom_call.1']
    #allocation5 [shape = 'u8[4096]{0}', space=vmem, size = 0x1000, scoped, tag = 'input window, operand 1, single buffered']
    #allocation6 [shape = 's32[1]{0}', space=sflag, size = 0x4, scoped, tag = 'scoped memory for tpu_custom_call.1']
    #allocation7 [shape = 'u8[32768]{0}', space=vmem, size = 0x8000, scoped, tag = 'input window, operand 3, single buffered']
    #allocation8 [shape = 'u8[32768]{0}', space=vmem, size = 0x8000, scoped, tag = 'input window, operand 5, single buffered']
    #allocation9 [shape = 's32[1]{0}', space=sflag, size = 0x4, scoped, tag = 'scoped memory for tpu_custom_call.1']
    #allocation10 [shape = 'u8[1024]{0}', space=vmem, size = 0x400, scoped, tag = 'output window, operand 0, single buffered']
    %12 = vsyncpa [#allocation3], 0
    %13 = vsyncpa [#allocation6], 0
    %14 = vsyncpa [#allocation9], 0
    %15 = vsyncpa [#allocation4], 0
    // Predicated region
    $region2: #{tpu_custom_call.1} parent=1 // pred_check
      _
    $region3: #{tpu_custom_call.1} parent=1 // pred_check_branch
      %17 = sbr.rel (0) target = $region5
    $region4: #{tpu_custom_call.1} parent=1 // pred_region
      %s19 = ssub.s32 32, 32
      %20 = vsyncadd [#allocation3], %s19
      %s22 = sshll.u32 [#allocation2], 4
      %s23 = int_to_ptr.vmem [resolvable:$true] %s22
      %25 = dma.hbm_to_vmem [thread:$0]  %s0, 32, %s23, [#allocation3]
    $region5: #{tpu_custom_call.1} parent=1 // pred_fallthru
      _
    // Predicated region
    $region6: #{tpu_custom_call.1} parent=1 // pred_check
      _
    $region7: #{tpu_custom_call.1} parent=1 // pred_check_branch
      %27 = sbr.rel (0) target = $region9
    $region8: #{tpu_custom_call.1} parent=1 // pred_region
      %s29 = ssub.s32 128, 128
      %30 = vsyncadd [#allocation6], %s29
      %s31 = sshll.u32 [#allocation5], 4
      %s32 = int_to_ptr.vmem [resolvable:$true] %s31
      %37 = dma.hbm_to_vmem [thread:$0]  %s1, 128, %s32, [#allocation6], 64, 64, 4
    $region9: #{tpu_custom_call.1} parent=1 // pred_fallthru
      _
    // Predicated region
    $region10: #{tpu_custom_call.1} parent=1 // pred_check
      _
    $region11: #{tpu_custom_call.1} parent=1 // pred_check_branch
      %39 = sbr.rel (0) target = $region13
    $region12: #{tpu_custom_call.1} parent=1 // pred_region
      _
    $region13: #{tpu_custom_call.1} parent=1 // pred_fallthru
      _
    // Predicated region
    $region14: #{tpu_custom_call.1} parent=1 // pred_check
      _
    $region15: #{tpu_custom_call.1} parent=1 // pred_check_branch
      %41 = sbr.rel (0) target = $region17
    $region16: #{tpu_custom_call.1} parent=1 // pred_region
      %s43 = ssub.s32 1024, 1024
      %44 = vsyncadd [#allocation6], %s43
      %s45 = sshll.u32 [#allocation7], 4
      %s46 = int_to_ptr.vmem [resolvable:$true] %s45
      %51 = dma.hbm_to_vmem [thread:$0]  %s3, 1024, %s46, [#allocation6], 64, 64, 4
    $region17: #{tpu_custom_call.1} parent=1 // pred_fallthru
      _
    // Predicated region
    $region18: #{tpu_custom_call.1} parent=1 // pred_check
      _
    $region19: #{tpu_custom_call.1} parent=1 // pred_check_branch
      %53 = sbr.rel (0) target = $region21
    $region20: #{tpu_custom_call.1} parent=1 // pred_region
      _
    $region21: #{tpu_custom_call.1} parent=1 // pred_fallthru
      _
    // Predicated region
    $region22: #{tpu_custom_call.1} parent=1 // pred_check
      _
    $region23: #{tpu_custom_call.1} parent=1 // pred_check_branch
      %55 = sbr.rel (0) target = $region25
    $region24: #{tpu_custom_call.1} parent=1 // pred_region
      %s57 = ssub.s32 1024, 1024
      %58 = vsyncadd [#allocation9], %s57
      %s59 = sshll.u32 [#allocation8], 4
      %s60 = int_to_ptr.vmem [resolvable:$true] %s59
      %65 = dma.hbm_to_vmem [thread:$0]  %s5, 1024, %s60, [#allocation9], 64, 64, 4
    $region25: #{tpu_custom_call.1} parent=1 // pred_fallthru
      _
    // Predicated region
    $region26: #{tpu_custom_call.1} parent=1 // pred_check
      _
    $region27: #{tpu_custom_call.1} parent=1 // pred_check_branch
      %67 = sbr.rel (0) target = $region29
    $region28: #{tpu_custom_call.1} parent=1 // pred_region
      _
    $region29: #{tpu_custom_call.1} parent=1 // pred_fallthru
      _
    // Predicated region
    $region30: #{tpu_custom_call.1} parent=1 // pred_check
      _
    $region31: #{tpu_custom_call.1} parent=1 // pred_check_branch
      %69 = sbr.rel (0) target = $region33
    $region32: #{tpu_custom_call.1} parent=1 // pred_region
      %70 = dma.done [#allocation3], 32
    $region33: #{tpu_custom_call.1} parent=1 // pred_fallthru
      _
    // Predicated region
    $region34: #{tpu_custom_call.1} parent=1 // pred_check
      _
    $region35: #{tpu_custom_call.1} parent=1 // pred_check_branch
      %72 = sbr.rel (0) target = $region37
    $region36: #{tpu_custom_call.1} parent=1 // pred_region
      %73 = dma.done [#allocation6], 128
    $region37: #{tpu_custom_call.1} parent=1 // pred_fallthru
      _
    // Predicated region
    $region38: #{tpu_custom_call.1} parent=1 // pred_check
      _
    $region39: #{tpu_custom_call.1} parent=1 // pred_check_branch
      %75 = sbr.rel (0) target = $region41
    $region40: #{tpu_custom_call.1} parent=1 // pred_region
      %76 = dma.done [#allocation6], 1024
    $region41: #{tpu_custom_call.1} parent=1 // pred_fallthru
      _
    // Predicated region
    $region42: #{tpu_custom_call.1} parent=1 // pred_check
      _
    $region43: #{tpu_custom_call.1} parent=1 // pred_check_branch
      %78 = sbr.rel (0) target = $region45
    $region44: #{tpu_custom_call.1} parent=1 // pred_region
      %79 = dma.done [#allocation9], 1024
    $region45: #{tpu_custom_call.1} parent=1 // pred_fallthru
      _
    %v81 = vld [vmem:[#allocation2] sm:$0x3]
    %v82 = vpack.c.bf16 %v81, %v81
    %v83 = vld [vmem:[#allocation5] sm:$0xf]
    %v84 = vld [vmem:[#allocation5 + $0x4] sm:$0xf]
    %v85 = vld [vmem:[%s2] sm:$0x1]
    %v87 = vlaneseq
    %v88 = vshrl.u32 %v87, 7
    %v89 = vsub.s32 0, %v88
    %v90 = vrot.slane %v85, %v89
    %v94 = vunpack.c.l.b16 %v83
    %v95 = vunpack.c.l.b16 %v84
    %v96 = vpack.c.b16 %v95, %v94
    %vm98 = vcmask 130048
    %v100 = vsel %vm98, %v82, 0
    %102 = vmatprep.subr.bf16.mxu0 0
    %103 = vmatpush1.bf16.msra.mxu0 %v96
    %104 = vmatprep.subr.bf16.mxu0 0
    %105 = vmatpush1.bf16.msra.mxu0 0
    %106 = vmatprep.subr.bf16.mxu0 0
    %107 = vmatpush1.bf16.msra.mxu0 0
    %108 = vmatprep.subr.bf16.mxu0 0
    %109 = vmatpush1.bf16.msra.mxu0 0
    %110 = vmatprep.subr.bf16.mxu0 0
    %111 = vmatpush1.bf16.msra.mxu0 0
    %112 = vmatprep.subr.bf16.mxu0 0
    %113 = vmatpush1.bf16.msra.mxu0 0
    %114 = vmatprep.subr.bf16.mxu0 0
    %115 = vmatpush1.bf16.msra.mxu0 0
    %116 = vmatprep.subr.bf16.mxu0 0
    %117 = vmatpush1.bf16.msra.mxu0 0
    %118 = vmatprep.subr.bf16.mxu0 0
    %119 = vmatpush1.bf16.msra.mxu0 0
    %120 = vmatprep.subr.bf16.mxu0 0
    %121 = vmatpush1.bf16.msra.mxu0 0
    %122 = vmatprep.subr.bf16.mxu0 0
    %123 = vmatpush1.bf16.msra.mxu0 0
    %124 = vmatprep.subr.bf16.mxu0 0
    %125 = vmatpush1.bf16.msra.mxu0 0
    %126 = vmatprep.subr.bf16.mxu0 0
    %127 = vmatpush1.bf16.msra.mxu0 0
    %128 = vmatprep.subr.bf16.mxu0 0
    %129 = vmatpush1.bf16.msra.mxu0 0
    %130 = vmatprep.subr.bf16.mxu0 0
    %131 = vmatpush1.bf16.msra.mxu0 0
    %132 = vmatprep.subr.bf16.mxu0 0
    %133 = vmatpush1.bf16.msra.mxu0 0
    %134 = vmatprep.mubr.bf16.mxu0 0
    %135 = vmatmul.mubr.bf16.gmra.mrb[0].mxu0 %v100
    %v136 = vpop.f32.mrb[0].mxu0
    %v137 = vadd.f32 %v90, %v136
    %v138 = vpop.f32.mrb[0].mxu0
    %v139 = vpop.f32.mrb[0].mxu0
    %v140 = vpop.f32.mrb[0].mxu0
    %141 = vdwg.mxu0
    %v142 = vpack.c.bf16 %v137, %v137
    %v143 = vld [vmem:[#allocation7] sm:$0xf]
    %v144 = vld [vmem:[#allocation7 + $0x4] sm:$0xf]
    %v145 = vld [vmem:[#allocation7 + $0x8] sm:$0xf]
    %v146 = vld [vmem:[#allocation7 + $0xc] sm:$0xf]
    %v147 = vld [vmem:[#allocation7 + $0x10] sm:$0xf]
    %v148 = vld [vmem:[#allocation7 + $0x14] sm:$0xf]
    %v149 = vld [vmem:[#allocation7 + $0x18] sm:$0xf]
    %v150 = vld [vmem:[#allocation7 + $0x1c] sm:$0xf]
    %v151 = vld [vmem:[#allocation7 + $0x20] sm:$0xf]
    %v152 = vld [vmem:[#allocation7 + $0x24] sm:$0xf]
    %v153 = vld [vmem:[#allocation7 + $0x28] sm:$0xf]
    %v154 = vld [vmem:[#allocation7 + $0x2c] sm:$0xf]
    %v155 = vld [vmem:[#allocation7 + $0x30] sm:$0xf]
    %v156 = vld [vmem:[#allocation7 + $0x34] sm:$0xf]
    %v157 = vld [vmem:[#allocation7 + $0x38] sm:$0xf]
    %v158 = vld [vmem:[#allocation7 + $0x3c] sm:$0xf]
    %v159 = vld [vmem:[%s4] sm:$0x1]
    %v161 = vlaneseq
    %v162 = vshrl.u32 %v161, 7
    %v163 = vsub.s32 0, %v162
    %v164 = vrot.slane %v159, %v163
    %v182 = vunpack.c.l.b16 %v143
    %v183 = vunpack.c.l.b16 %v144
    %v184 = vunpack.c.l.b16 %v145
    %v185 = vunpack.c.l.b16 %v146
    %v186 = vunpack.c.l.b16 %v147
    %v187 = vunpack.c.l.b16 %v148
    %v188 = vunpack.c.l.b16 %v149
    %v189 = vunpack.c.l.b16 %v150
    %v190 = vunpack.c.l.b16 %v151
    %v191 = vunpack.c.l.b16 %v152
    %v192 = vunpack.c.l.b16 %v153
    %v193 = vunpack.c.l.b16 %v154
    %v194 = vunpack.c.l.b16 %v155
    %v195 = vunpack.c.l.b16 %v156
    %v196 = vunpack.c.l.b16 %v157
    %v197 = vunpack.c.l.b16 %v158
    %v198 = vpack.c.b16 %v183, %v182
    %v199 = vpack.c.b16 %v185, %v184
    %v200 = vpack.c.b16 %v187, %v186
    %v201 = vpack.c.b16 %v189, %v188
    %v202 = vpack.c.b16 %v191, %v190
    %v203 = vpack.c.b16 %v193, %v192
    %v204 = vpack.c.b16 %v195, %v194
    %v205 = vpack.c.b16 %v197, %v196
    %214 = vmatprep.subr.bf16.mxu0 0
    %215 = vmatpush1.bf16.msra.mxu0 %v198
    %216 = vmatprep.subr.bf16.mxu0 0
    %217 = vmatpush1.bf16.msra.mxu0 %v199
    %218 = vmatprep.subr.bf16.mxu0 0
    %219 = vmatpush1.bf16.msra.mxu0 %v200
    %220 = vmatprep.subr.bf16.mxu0 0
    %221 = vmatpush1.bf16.msra.mxu0 %v201
    %222 = vmatprep.subr.bf16.mxu0 0
    %223 = vmatpush1.bf16.msra.mxu0 %v202
    %224 = vmatprep.subr.bf16.mxu0 0
    %225 = vmatpush1.bf16.msra.mxu0 %v203
    %226 = vmatprep.subr.bf16.mxu0 0
    %227 = vmatpush1.bf16.msra.mxu0 %v204
    %228 = vmatprep.subr.bf16.mxu0 0
    %229 = vmatpush1.bf16.msra.mxu0 %v205
    %230 = vmatprep.subr.bf16.mxu0 0
    %231 = vmatpush1.bf16.msra.mxu0 0
    %232 = vmatprep.subr.bf16.mxu0 0
    %233 = vmatpush1.bf16.msra.mxu0 0
    %234 = vmatprep.subr.bf16.mxu0 0
    %235 = vmatpush1.bf16.msra.mxu0 0
    %236 = vmatprep.subr.bf16.mxu0 0
    %237 = vmatpush1.bf16.msra.mxu0 0
    %238 = vmatprep.subr.bf16.mxu0 0
    %239 = vmatpush1.bf16.msra.mxu0 0
    %240 = vmatprep.subr.bf16.mxu0 0
    %241 = vmatpush1.bf16.msra.mxu0 0
    %242 = vmatprep.subr.bf16.mxu0 0
    %243 = vmatpush1.bf16.msra.mxu0 0
    %244 = vmatprep.subr.bf16.mxu0 0
    %245 = vmatpush1.bf16.msra.mxu0 0
    %246 = vmatprep.mubr.bf16.mxu0 0
    %247 = vmatmul.mubr.bf16.gmra.mrb[0].mxu0 %v142
    %v248 = vpop.f32.mrb[0].mxu0
    %v249 = vadd.f32 %v164, %v248
    %v250 = vpop.f32.mrb[0].mxu0
    %v251 = vpop.f32.mrb[0].mxu0
    %v252 = vpop.f32.mrb[0].mxu0
    %253 = vdwg.mxu0
    %v254 = vpack.c.bf16 %v249, %v249
    %v255 = vld [vmem:[#allocation8] sm:$0xf]
    %v256 = vld [vmem:[#allocation8 + $0x4] sm:$0xf]
    %v257 = vld [vmem:[#allocation8 + $0x8] sm:$0xf]
    %v258 = vld [vmem:[#allocation8 + $0xc] sm:$0xf]
    %v259 = vld [vmem:[#allocation8 + $0x10] sm:$0xf]
    %v260 = vld [vmem:[#allocation8 + $0x14] sm:$0xf]
    %v261 = vld [vmem:[#allocation8 + $0x18] sm:$0xf]
    %v262 = vld [vmem:[#allocation8 + $0x1c] sm:$0xf]
    %v263 = vld [vmem:[#allocation8 + $0x20] sm:$0xf]
    %v264 = vld [vmem:[#allocation8 + $0x24] sm:$0xf]
    %v265 = vld [vmem:[#allocation8 + $0x28] sm:$0xf]
    %v266 = vld [vmem:[#allocation8 + $0x2c] sm:$0xf]
    %v267 = vld [vmem:[#allocation8 + $0x30] sm:$0xf]
    %v268 = vld [vmem:[#allocation8 + $0x34] sm:$0xf]
    %v269 = vld [vmem:[#allocation8 + $0x38] sm:$0xf]
    %v270 = vld [vmem:[#allocation8 + $0x3c] sm:$0xf]
    %v271 = vld [vmem:[%s6] sm:$0x1]
    %v273 = vlaneseq
    %v274 = vshrl.u32 %v273, 7
    %v275 = vsub.s32 0, %v274
    %v276 = vrot.slane %v271, %v275
    %v294 = vunpack.c.l.b16 %v255
    %v295 = vunpack.c.l.b16 %v256
    %v296 = vunpack.c.l.b16 %v257
    %v297 = vunpack.c.l.b16 %v258
    %v298 = vunpack.c.l.b16 %v259
    %v299 = vunpack.c.l.b16 %v260
    %v300 = vunpack.c.l.b16 %v261
    %v301 = vunpack.c.l.b16 %v262
    %v302 = vunpack.c.l.b16 %v263
    %v303 = vunpack.c.l.b16 %v264
    %v304 = vunpack.c.l.b16 %v265
    %v305 = vunpack.c.l.b16 %v266
    %v306 = vunpack.c.l.b16 %v267
    %v307 = vunpack.c.l.b16 %v268
    %v308 = vunpack.c.l.b16 %v269
    %v309 = vunpack.c.l.b16 %v270
    %v310 = vpack.c.b16 %v295, %v294
    %v311 = vpack.c.b16 %v297, %v296
    %v312 = vpack.c.b16 %v299, %v298
    %v313 = vpack.c.b16 %v301, %v300
    %v314 = vpack.c.b16 %v303, %v302
    %v315 = vpack.c.b16 %v305, %v304
    %v316 = vpack.c.b16 %v307, %v306
    %v317 = vpack.c.b16 %v309, %v308
    %326 = vmatprep.subr.bf16.mxu0 0
    %327 = vmatpush1.bf16.msra.mxu0 %v310
    %328 = vmatprep.subr.bf16.mxu0 0
    %329 = vmatpush1.bf16.msra.mxu0 %v311
    %330 = vmatprep.subr.bf16.mxu0 0
    %331 = vmatpush1.bf16.msra.mxu0 %v312
    %332 = vmatprep.subr.bf16.mxu0 0
    %333 = vmatpush1.bf16.msra.mxu0 %v313
    %334 = vmatprep.subr.bf16.mxu0 0
    %335 = vmatpush1.bf16.msra.mxu0 %v314
    %336 = vmatprep.subr.bf16.mxu0 0
    %337 = vmatpush1.bf16.msra.mxu0 %v315
    %338 = vmatprep.subr.bf16.mxu0 0
    %339 = vmatpush1.bf16.msra.mxu0 %v316
    %340 = vmatprep.subr.bf16.mxu0 0
    %341 = vmatpush1.bf16.msra.mxu0 %v317
    %342 = vmatprep.subr.bf16.mxu0 0
    %343 = vmatpush1.bf16.msra.mxu0 0
    %344 = vmatprep.subr.bf16.mxu0 0
    %345 = vmatpush1.bf16.msra.mxu0 0
    %346 = vmatprep.subr.bf16.mxu0 0
    %347 = vmatpush1.bf16.msra.mxu0 0
    %348 = vmatprep.subr.bf16.mxu0 0
    %349 = vmatpush1.bf16.msra.mxu0 0
    %350 = vmatprep.subr.bf16.mxu0 0
    %351 = vmatpush1.bf16.msra.mxu0 0
    %352 = vmatprep.subr.bf16.mxu0 0
    %353 = vmatpush1.bf16.msra.mxu0 0
    %354 = vmatprep.subr.bf16.mxu0 0
    %355 = vmatpush1.bf16.msra.mxu0 0
    %356 = vmatprep.subr.bf16.mxu0 0
    %357 = vmatpush1.bf16.msra.mxu0 0
    %358 = vmatprep.mubr.bf16.mxu0 0
    %359 = vmatmul.mubr.bf16.gmra.mrb[0].mxu0 %v254
    %v360 = vpop.f32.mrb[0].mxu0
    %v361 = vadd.f32 %v276, %v360
    %v362 = vpop.f32.mrb[0].mxu0
    %v363 = vpop.f32.mrb[0].mxu0
    %v364 = vpop.f32.mrb[0].mxu0
    %365 = vdwg.mxu0
    %366 = vst [vmem:[#allocation10] sm:$0x3] %v361
    // Predicated region
    $region46: #{tpu_custom_call.1} parent=1 // pred_check
      _
    $region47: #{tpu_custom_call.1} parent=1 // pred_check_branch
      %368 = sbr.rel (0) target = $region49
    $region48: #{tpu_custom_call.1} parent=1 // pred_region
      %s370 = ssub.s32 32, 32
      %371 = vsyncadd [#allocation4], %s370
      %s373 = sshll.u32 [#allocation10], 4
      %s374 = int_to_ptr.vmem [resolvable:$true] %s373
      %376 = dma.vmem_to_hbm [thread:$0]  %s374, 32, %s7, [#allocation4]
    $region49: #{tpu_custom_call.1} parent=1 // pred_fallthru
      _
    // Predicated region
    $region50: #{tpu_custom_call.1} parent=1 // pred_check
      _
    $region51: #{tpu_custom_call.1} parent=1 // pred_check_branch
      %378 = sbr.rel (0) target = $region53
    $region52: #{tpu_custom_call.1} parent=1 // pred_region
      %379 = dma.done [#allocation4], 32
    $region53: #{tpu_custom_call.1} parent=1 // pred_fallthru
      _
    %380 = vsyncpa [#allocation3], 1
    %381 = vsyncpa [#allocation6], 1
    %382 = vsyncpa [#allocation9], 1
    %383 = vsyncpa [#allocation4], 1

</llo_original>
